<compile_context>
chip_gen: v6e
topology: v6e:2x2x1
jax: 0.10.0
libtpu: 0.0.40
codegen_flags: <defaults>
</compile_context>

<pallas_src>
import functools

import jax
import jax.numpy as jnp
import numpy as np
from jax.experimental import pallas as pl
from jax.experimental.pallas import tpu as pltpu


def _resblock_kernel(H, x_ref, wcat_ref, b1_ref, w2_ref, b2br_ref, o_ref):
    # x_ref:   (rows, W*Cin)        rows = Nb*H, lane-dense activation slab (f32)
    # wcat:    (W*Cin, 4*W*Cout)    bf16 [tap kh=0 | tap kh=1 | tap kh=2 | residual 1x1]
    # b1:      (1, W*Cout)          f32  conv1 bias tiled over w
    # w2:      (W*Cout, W*Cout)     bf16 block-diagonal 1x1 conv2 weight
    # b2br:    (1, W*Cout)          f32  conv2 bias + residual bias, tiled over w
    # o_ref:   (rows, W*Cout)
    rows = x_ref.shape[0]
    wc = o_ref.shape[1]

    # Stage 1: ONE fused MXU push for all per-pixel matmuls (bf16 operands, f32 accumulation).
    x2d = x_ref[...].astype(jnp.bfloat16)
    y = jnp.dot(x2d, wcat_ref[...], preferred_element_type=jnp.float32)   # (rows, 4*W*Cout)
    y0 = y[:, 0 * wc:1 * wc]    # contribution of input row h through tap kh=0 (used at h+1)
    y1 = y[:, 1 * wc:2 * wc]    # center tap kh=1
    y2 = y[:, 2 * wc:3 * wc]    # tap kh=2 (used at h-1)
    res = y[:, 3 * wc:4 * wc]   # residual 1x1 conv (its bias folded into b2br)

    # (3,1) conv, padding (1,0): out[h] = y0[h-1] + y1[h] + y2[h+1], zero at image borders.
    # Shifts are XLU rotates (idle slot) + iota masks; masking on h = row mod H also kills
    # cross-image wraparound when multiple images share one flattened slab.
    row = jax.lax.broadcasted_iota(jnp.int32, (rows, wc), 0)
    h_idx = (row & (H - 1)) if (H & (H - 1)) == 0 else (row % H)
    y0s = jnp.where(h_idx == 0, 0.0, pltpu.roll(y0, shift=1, axis=0))          # y0[h-1]
    y2s = jnp.where(h_idx == H - 1, 0.0, pltpu.roll(y2, shift=rows - 1, axis=0))  # y2[h+1]

    out1 = jnp.maximum(y0s + y1 + y2s + b1_ref[...], 0.0)                 # conv1 + ReLU (f32 VPU)

    # Stage 2: conv2 (1x1) as one block-diagonal MXU push; epilogue fuses residual + biases.
    out2 = jnp.dot(out1.astype(jnp.bfloat16), w2_ref[...],
                   preferred_element_type=jnp.float32)                    # (rows, W*Cout)
    o_ref[...] = (out2 + res + b2br_ref[...]).astype(o_ref.dtype)


def prepare_resblock_params(w1_t, b1_t, w2_t, b2_t, wr_t, br_t, *, W):
    """One-time (per parameter set) packing of PyTorch-layout weights into the kernel's
    block-diagonal, lane-dense bf16 form.  Keep this out of the per-batch forward path."""
    Cout, Cin = w1_t.shape[0], w1_t.shape[1]
    f32 = jnp.float32

    w1_taps = jnp.transpose(w1_t[:, :, :, 0], (2, 1, 0)).astype(f32)   # (3, Cin, Cout)
    w2 = jnp.transpose(w2_t[:, :, 0, 0], (1, 0)).astype(f32)           # (Cout, Cout)
    if wr_t is None:                                                    # nn.Identity branch
        if Cin != Cout:
            raise ValueError("Identity residual requires in_channels == out_channels.")
        wr = jnp.eye(Cin, dtype=f32)
        br = jnp.zeros((Cout,), f32)
    else:
        wr = jnp.transpose(wr_t[:, :, 0, 0], (1, 0)).astype(f32)       # (Cin, Cout)
        br = br_t.astype(f32)

    eye_w = jnp.eye(W, dtype=f32)
    # Block-diagonal per-pixel weights so the kernel works on lane-dense (rows, W*C) slabs.
    # NOTE: these weights are O(W^2 * C^2); ~0.1 MiB at the toy shapes below.
    # TODO(synk): for large W/C add a grid axis over W with per-tile block-diagonal weight
    #             slices (v7x's 64 MiB VMEM binds first).
    wcat = jnp.concatenate(
        [jnp.kron(eye_w, w1_taps[0]),
         jnp.kron(eye_w, w1_taps[1]),
         jnp.kron(eye_w, w1_taps[2]),
         jnp.kron(eye_w, wr)], axis=1).astype(jnp.bfloat16)             # (W*Cin, 4*W*Cout)
    w2_big = jnp.kron(eye_w, w2).astype(jnp.bfloat16)                   # (W*Cout, W*Cout)
    b1_tile = jnp.tile(b1_t.astype(f32), W)[None, :]                    # (1, W*Cout)
    b2br_tile = jnp.tile(b2_t.astype(f32) + br, W)[None, :]             # (1, W*Cout)

    weight_bytes = wcat.size * 2 + w2_big.size * 2
    assert weight_bytes < 32 * 1024 * 1024, "block-diagonal weights too large; tile over W"

    return dict(wcat=wcat, b1=b1_tile, w2=w2_big, b2br=b2br_tile, Cin=Cin, Cout=Cout)


def _grid_steps_for_batch(n):
    """2 parallel grid steps on dual-TC chips (v7x), 1 step on single-TC chips (v5e/v6e)."""
    try:
        kind = jax.devices()[0].device_kind.lower()
    except Exception:
        kind = ""
    single_tc = ("lite" in kind) or ("v5e" in kind) or ("v6e" in kind)
    cores = 1 if single_tc else 2
    return cores if (n % cores == 0 and n >= cores) else 1


def residual_conv_block(x_nhwc, params):
    """ResidualConvBlock forward. x_nhwc: (N, H, W, Cin), activations stay NHWC end-to-end
    so the lane-dense (rows, W*C) slabs are free reshapes (no layout flip outside the kernel)."""
    N, H, W, Cin = x_nhwc.shape
    assert Cin == params["Cin"]
    Cout = params["Cout"]

    steps = _grid_steps_for_batch(N)
    nb = N // steps
    rows = nb * H                                   # rows per grid step

    x_flat = x_nhwc.reshape(N * H, W * Cin)         # free reshape of contiguous NHWC

    out_flat = pl.pallas_call(
        functools.partial(_resblock_kernel, H),
        out_shape=jax.ShapeDtypeStruct((N * H, W * Cout), x_nhwc.dtype),
        grid=(steps,),
        in_specs=[
            pl.BlockSpec((rows, W * Cin), lambda n: (n, 0)),
            pl.BlockSpec(params["wcat"].shape, lambda n: (0, 0)),
            pl.BlockSpec(params["b1"].shape, lambda n: (0, 0)),
            pl.BlockSpec(params["w2"].shape, lambda n: (0, 0)),
            pl.BlockSpec(params["b2br"].shape, lambda n: (0, 0)),
        ],
        out_specs=pl.BlockSpec((rows, W * Cout), lambda n: (n, 0)),
        compiler_params=pltpu.CompilerParams(dimension_semantics=("parallel",)),
    )(x_flat, params["wcat"], params["b1"], params["w2"], params["b2br"])

    return out_flat.reshape(N, H, W, Cout)


def conv2d_ref(x_nchw, w_oihw, b, pad_h, pad_w):
    y = jax.lax.conv_general_dilated(
        x_nchw, w_oihw, window_strides=(1, 1),
        padding=((pad_h, pad_h), (pad_w, pad_w)),
        dimension_numbers=("NCHW", "OIHW", "NCHW"))
    return y + b[None, :, None, None]


if __name__ == "__main__":
    # Small shapes consistent with the module: batch=2, in_channels=4, out_channels=8, 16x16.
    N, Cin, Cout, H, W = 2, 4, 8, 16, 16
    key = jax.random.PRNGKey(0)
    kx, k1, kb1, k2, kb2, kr, kbr = jax.random.split(key, 7)

    # Activations generated directly in NHWC (lane-dense) layout.
    x_nhwc = jax.random.normal(kx, (N, H, W, Cin), jnp.float32)

    # Parameters in PyTorch layouts (OIHW weights, (O,) biases).
    w1_t = 0.1 * jax.random.normal(k1, (Cout, Cin, 3, 1), jnp.float32)   # conv1 (3,1)
    b1_t = 0.1 * jax.random.normal(kb1, (Cout,), jnp.float32)
    w2_t = 0.1 * jax.random.normal(k2, (Cout, Cout, 1, 1), jnp.float32)  # conv2 1x1
    b2_t = 0.1 * jax.random.normal(kb2, (Cout,), jnp.float32)
    wr_t = 0.1 * jax.random.normal(kr, (Cout, Cin, 1, 1), jnp.float32)   # residual 1x1 (Cin != Cout)
    br_t = 0.1 * jax.random.normal(kbr, (Cout,), jnp.float32)

    # One-time weight packing (hoisted out of the per-batch path); the jitted forward's
    # traced body is just the pallas_call.
    params = prepare_resblock_params(w1_t, b1_t, w2_t, b2_t, wr_t, br_t, W=W)
    fwd = jax.jit(lambda x: residual_conv_block(x, params))

    out_nhwc = jax.block_until_ready(fwd(x_nhwc))

    # Pure-JAX f32 reference of the PyTorch forward pass (NCHW, un-packed weights).
    x_nchw = jnp.transpose(x_nhwc, (0, 3, 1, 2))
    h1 = jax.nn.relu(conv2d_ref(x_nchw, w1_t, b1_t, pad_h=1, pad_w=0))
    h2 = conv2d_ref(h1, w2_t, b2_t, pad_h=0, pad_w=0)
    ref_nchw = h2 + conv2d_ref(x_nchw, wr_t, br_t, pad_h=0, pad_w=0)
    ref_nhwc = jnp.transpose(ref_nchw, (0, 2, 3, 1))

    assert out_nhwc.shape == (N, H, W, Cout)
    # bf16 MXU operands (f32 accumulation) vs f32 reference -> allow ~1-2% tolerance.
    np.testing.assert_allclose(np.asarray(out_nhwc), np.asarray(ref_nhwc), rtol=2e-2, atol=2e-2)
    print("KERNEL_OK")
</pallas_src>

<mosaic_0001>
module attributes {stable_mosaic.version = 11 : i64} {
  func.func @_resblock_kernel(%arg0: i32, %arg1: memref<16x64xf32, #tpu.memory_space<vmem>>, %arg2: memref<64x512xbf16, #tpu.memory_space<vmem>>, %arg3: memref<1x128xf32, #tpu.memory_space<vmem>>, %arg4: memref<128x128xbf16, #tpu.memory_space<vmem>>, %arg5: memref<1x128xf32, #tpu.memory_space<vmem>>, %arg6: memref<16x128xf32, #tpu.memory_space<vmem>>) attributes {dimension_semantics = [#tpu.dimension_semantics<parallel>], iteration_bounds = array<i64: 2>, scalar_prefetch = 0 : i64, scratch_operands = 0 : i64, tpu.core_type = #tpu.core_type<tc>, window_params = [{transform_indices = @transform_0, window_bounds = array<i64: 16, 64>}, {pipeline_mode = #tpu.pipeline_mode<synchronous>, transform_indices = @transform_1, window_bounds = array<i64: 64, 512>}, {pipeline_mode = #tpu.pipeline_mode<synchronous>, transform_indices = @transform_2, window_bounds = array<i64: 1, 128>}, {pipeline_mode = #tpu.pipeline_mode<synchronous>, transform_indices = @transform_3, window_bounds = array<i64: 128, 128>}, {pipeline_mode = #tpu.pipeline_mode<synchronous>, transform_indices = @transform_4, window_bounds = array<i64: 1, 128>}, {transform_indices = @transform_5, window_bounds = array<i64: 16, 128>}]} {
    %c0 = arith.constant 0 : index
    %c0_0 = arith.constant 0 : index
    %0 = vector.load %arg1[%c0, %c0_0] : memref<16x64xf32, #tpu.memory_space<vmem>>, vector<16x64xf32>
    %1 = arith.truncf %0 : vector<16x64xf32> to vector<16x64xbf16>
    %c0_1 = arith.constant 0 : index
    %c0_2 = arith.constant 0 : index
    %2 = vector.load %arg2[%c0_1, %c0_2] : memref<64x512xbf16, #tpu.memory_space<vmem>>, vector<64x512xbf16>
    %cst = arith.constant dense<0.000000e+00> : vector<16x512xf32>
    %3 = tpu.matmul %1, %2, %cst {dimension_numbers = #tpu.dot_dimension_numbers<[1], [0], [0], [1], [0, 0, 1, 1], [], []>} : vector<16x64xbf16>, vector<64x512xbf16>, vector<16x512xf32> -> vector<16x512xf32>
    %4 = vector.extract_strided_slice %3 {offsets = [0, 0], sizes = [16, 128], strides = [1, 1]} : vector<16x512xf32> to vector<16x128xf32>
    %5 = vector.extract_strided_slice %3 {offsets = [0, 128], sizes = [16, 128], strides = [1, 1]} : vector<16x512xf32> to vector<16x128xf32>
    %6 = vector.extract_strided_slice %3 {offsets = [0, 256], sizes = [16, 128], strides = [1, 1]} : vector<16x512xf32> to vector<16x128xf32>
    %7 = vector.extract_strided_slice %3 {offsets = [0, 384], sizes = [16, 128], strides = [1, 1]} : vector<16x512xf32> to vector<16x128xf32>
    %8 = tpu.iota {dimensions = array<i32: 0>} : vector<16x128xi32>
    %c15_i32 = arith.constant 15 : i32
    %9 = vector.broadcast %c15_i32 : i32 to vector<16x128xi32>
    %10 = arith.andi %8, %9 : vector<16x128xi32>
    %c0_i32 = arith.constant 0 : i32
    %11 = vector.broadcast %c0_i32 : i32 to vector<16x128xi32>
    %12 = arith.cmpi eq, %10, %11 : vector<16x128xi32>
    %c1_i32 = arith.constant 1 : i32
    %13 = tpu.dynamic_rotate %4 by %c1_i32 dim 0 : vector<16x128xf32>, i32 -> vector<16x128xf32>
    %cst_3 = arith.constant 0.000000e+00 : f32
    %14 = vector.broadcast %cst_3 : f32 to vector<16x128xf32>
    %15 = arith.select %12, %14, %13 : vector<16x128xi1>, vector<16x128xf32>
    %c15_i32_4 = arith.constant 15 : i32
    %16 = vector.broadcast %c15_i32_4 : i32 to vector<16x128xi32>
    %17 = arith.cmpi eq, %10, %16 : vector<16x128xi32>
    %c15_i32_5 = arith.constant 15 : i32
    %18 = tpu.dynamic_rotate %6 by %c15_i32_5 dim 0 : vector<16x128xf32>, i32 -> vector<16x128xf32>
    %cst_6 = arith.constant 0.000000e+00 : f32
    %19 = vector.broadcast %cst_6 : f32 to vector<16x128xf32>
    %20 = arith.select %17, %19, %18 : vector<16x128xi1>, vector<16x128xf32>
    %21 = arith.addf %15, %5 : vector<16x128xf32>
    %22 = arith.addf %21, %20 : vector<16x128xf32>
    %c0_7 = arith.constant 0 : index
    %c0_8 = arith.constant 0 : index
    %23 = vector.load %arg3[%c0_7, %c0_8] : memref<1x128xf32, #tpu.memory_space<vmem>>, vector<1x128xf32>
    %24 = vector.broadcast %23 : vector<1x128xf32> to vector<16x128xf32>
    %25 = arith.addf %22, %24 : vector<16x128xf32>
    %cst_9 = arith.constant 0.000000e+00 : f32
    %26 = vector.broadcast %cst_9 : f32 to vector<16x128xf32>
    %27 = arith.maximumf %25, %26 : vector<16x128xf32>
    %28 = arith.truncf %27 : vector<16x128xf32> to vector<16x128xbf16>
    %c0_10 = arith.constant 0 : index
    %c0_11 = arith.constant 0 : index
    %29 = vector.load %arg4[%c0_10, %c0_11] : memref<128x128xbf16, #tpu.memory_space<vmem>>, vector<128x128xbf16>
    %cst_12 = arith.constant dense<0.000000e+00> : vector<16x128xf32>
    %30 = tpu.matmul %28, %29, %cst_12 {dimension_numbers = #tpu.dot_dimension_numbers<[1], [0], [0], [1], [0, 0, 1, 1], [], []>} : vector<16x128xbf16>, vector<128x128xbf16>, vector<16x128xf32> -> vector<16x128xf32>
    %31 = arith.addf %30, %7 : vector<16x128xf32>
    %c0_13 = arith.constant 0 : index
    %c0_14 = arith.constant 0 : index
    %32 = vector.load %arg5[%c0_13, %c0_14] : memref<1x128xf32, #tpu.memory_space<vmem>>, vector<1x128xf32>
    %33 = vector.broadcast %32 : vector<1x128xf32> to vector<16x128xf32>
    %34 = arith.addf %31, %33 : vector<16x128xf32>
    %c0_15 = arith.constant 0 : index
    %c0_16 = arith.constant 0 : index
    %35 = vector.load %arg6[%c0_15, %c0_16] : memref<16x128xf32, #tpu.memory_space<vmem>>, vector<16x128xf32>
    tpu.vector_store %arg6[%c0_15, %c0_16], %34 {strides = array<i32>} : memref<16x128xf32, #tpu.memory_space<vmem>>, vector<16x128xf32>,
    return
  }
  func.func @transform_0(%arg0: i32) -> (i32, i32) {
    %c0_i32 = arith.constant 0 : i32
    %c0_i32_0 = arith.constant 0 : i32
    return %arg0, %c0_i32 : i32, i32
  }
  func.func @transform_1(%arg0: i32) -> (i32, i32) {
    %c0_i32 = arith.constant 0 : i32
    %c0_i32_0 = arith.constant 0 : i32
    %c0_i32_1 = arith.constant 0 : i32
    return %c0_i32, %c0_i32_0 : i32, i32
  }
  func.func @transform_2(%arg0: i32) -> (i32, i32) {
    %c0_i32 = arith.constant 0 : i32
    %c0_i32_0 = arith.constant 0 : i32
    %c0_i32_1 = arith.constant 0 : i32
    return %c0_i32, %c0_i32_0 : i32, i32
  }
  func.func @transform_3(%arg0: i32) -> (i32, i32) {
    %c0_i32 = arith.constant 0 : i32
    %c0_i32_0 = arith.constant 0 : i32
    %c0_i32_1 = arith.constant 0 : i32
    return %c0_i32, %c0_i32_0 : i32, i32
  }
  func.func @transform_4(%arg0: i32) -> (i32, i32) {
    %c0_i32 = arith.constant 0 : i32
    %c0_i32_0 = arith.constant 0 : i32
    %c0_i32_1 = arith.constant 0 : i32
    return %c0_i32, %c0_i32_0 : i32, i32
  }
  func.func @transform_5(%arg0: i32) -> (i32, i32) {
    %c0_i32 = arith.constant 0 : i32
    %c0_i32_0 = arith.constant 0 : i32
    return %arg0, %c0_i32 : i32, i32
  }
}

</mosaic_0001>

<llo_original>
// kernel: _lambda_.1
$region0: #{_lambda_.1}
  #allocation0 [shape = 'u32[]', space=smem, size = 0x4, offset = 0x4, fixed_abs, tag = 'smem constant byte address 0x4 - core index']
  #allocation1 [shape = 'u32[144,128]{1,0:T(1,128)}', space=vmem, size = 0x12000, scoped, tag = 'internal scratch']
  %s0 = inlined_call_operand.vmem [shape: f32[32,64], index: 0, kind: input, shape index: {}]
  %s1 = inlined_call_operand.vmem [shape: bf16[64,512], index: 1, kind: input, shape index: {}]
  %s2 = inlined_call_operand.vmem [shape: f32[1,128], index: 2, kind: input, shape index: {}]
  %s3 = inlined_call_operand.vmem [shape: bf16[128,128], index: 3, kind: input, shape index: {}]
  %s4 = inlined_call_operand.vmem [shape: f32[1,128], index: 4, kind: input, shape index: {}]
  %s5 = inlined_call_operand.vmem [shape: f32[32,128], index: 5, kind: output, shape index: {}]
  %s6 = sld [smem:[#allocation0]]
  $region53: #{_lambda_.1} parent=0
    _
  %s8 = ssub.s32 1, %s6
  %s9 = scalar_select 0, %s8, %s6
  loop: start=0, step=1, limit=4
  $region2: #{_lambda_.1} parent=0 // loop_pre_header
    _
  $region3: #{_lambda_.1} parent=0 // loop_header
    %s11 = sphi 0, %s15
    %p12 = scmp.ge.s32.totalorder %s11, 4
    %s21 = sphi 0, %s23
    %s24 = sphi 0, %s21
    %s25 = sphi 0, %s24
    %s41 = sphi 0, %s25
    %s45 = sphi 0, %s45
    %s47 = sphi 0, %s45
    %s48 = sphi 0, %s47
    %s62 = sphi 0, %s48
    %s66 = sphi 0, %s66
    %s68 = sphi 0, %s66
    %s69 = sphi 0, %s68
    %s83 = sphi 0, %s69
    %s87 = sphi 0, %s87
    %s89 = sphi 0, %s87
    %s90 = sphi 0, %s89
    %s104 = sphi 0, %s90
    %s108 = sphi 0, %s108
    %s110 = sphi 0, %s108
    %s111 = sphi 0, %s110
    %s125 = sphi 0, %s111
    %s131 = sphi 0, %s133
    %s134 = sphi 0, %s131
    %s135 = sphi 0, %s134
    %s151 = sphi 0, %s135
  $region4: #{_lambda_.1} parent=0 // loop_header_branch
    %14 = sbr.rel (%p12) target = $region8
  $region5: #{_lambda_.1} parent=0 // loop_body
    %s16 = ssub.s32 %s11, 1
    %s17 = ssub.s32 %s11, 2
    %s18 = sadd.s32 %s11, 1
    %s19 = ssub.s32 %s11, %s18
    %p20 = scmp.eq.s32.totalorder %s19, 0
    %s22 = sadd.s32 %s21, 1
    %s23 = scalar_select %p20, %s21, %s22
    %p26 = pneg %p20
    %p27 = scmp.eq.s32.totalorder %s11, 1
    %p28 = por %p26, %p27
    %p29 = scmp.ne.s32.totalorder %s21, %s24
    %p30 = scmp.eq.s32.totalorder %s11, 0
    %p31 = por %p29, %p30
    %p32 = scmp.ne.s32.totalorder %s21, %s24
    %p33 = scmp.eq.s32.totalorder %s16, 1
    %p34 = por %p32, %p33
    %p35 = scmp.ne.s32.totalorder %s24, %s25
    %p36 = scmp.eq.s32.totalorder %s16, 0
    %p37 = por %p35, %p36
    %p38 = scmp.ne.s32.totalorder %s24, %s25
    %p39 = scmp.eq.s32.totalorder %s17, 1
    %p40 = por %p38, %p39
    %p42 = scmp.ne.s32.totalorder %s25, %s41
    %p43 = scmp.eq.s32.totalorder %s17, 0
    %p44 = por %p42, %p43
    %s46 = sadd.s32 %s45, 1
    %p49 = scmp.eq.s32.totalorder %s11, 1
    %p50 = scmp.ne.s32.totalorder %s45, %s47
    %p51 = scmp.eq.s32.totalorder %s11, 0
    %p52 = por %p50, %p51
    %p53 = scmp.ne.s32.totalorder %s45, %s47
    %p54 = scmp.eq.s32.totalorder %s16, 1
    %p55 = por %p53, %p54
    %p56 = scmp.ne.s32.totalorder %s47, %s48
    %p57 = scmp.eq.s32.totalorder %s16, 0
    %p58 = por %p56, %p57
    %p59 = scmp.ne.s32.totalorder %s47, %s48
    %p60 = scmp.eq.s32.totalorder %s17, 1
    %p61 = por %p59, %p60
    %p63 = scmp.ne.s32.totalorder %s48, %s62
    %p64 = scmp.eq.s32.totalorder %s17, 0
    %p65 = por %p63, %p64
    %s67 = sadd.s32 %s66, 1
    %p70 = scmp.eq.s32.totalorder %s11, 1
    %p71 = scmp.ne.s32.totalorder %s66, %s68
    %p72 = scmp.eq.s32.totalorder %s11, 0
    %p73 = por %p71, %p72
    %p74 = scmp.ne.s32.totalorder %s66, %s68
    %p75 = scmp.eq.s32.totalorder %s16, 1
    %p76 = por %p74, %p75
    %p77 = scmp.ne.s32.totalorder %s68, %s69
    %p78 = scmp.eq.s32.totalorder %s16, 0
    %p79 = por %p77, %p78
    %p80 = scmp.ne.s32.totalorder %s68, %s69
    %p81 = scmp.eq.s32.totalorder %s17, 1
    %p82 = por %p80, %p81
    %p84 = scmp.ne.s32.totalorder %s69, %s83
    %p85 = scmp.eq.s32.totalorder %s17, 0
    %p86 = por %p84, %p85
    %s88 = sadd.s32 %s87, 1
    %p91 = scmp.eq.s32.totalorder %s11, 1
    %p92 = scmp.ne.s32.totalorder %s87, %s89
    %p93 = scmp.eq.s32.totalorder %s11, 0
    %p94 = por %p92, %p93
    %p95 = scmp.ne.s32.totalorder %s87, %s89
    %p96 = scmp.eq.s32.totalorder %s16, 1
    %p97 = por %p95, %p96
    %p98 = scmp.ne.s32.totalorder %s89, %s90
    %p99 = scmp.eq.s32.totalorder %s16, 0
    %p100 = por %p98, %p99
    %p101 = scmp.ne.s32.totalorder %s89, %s90
    %p102 = scmp.eq.s32.totalorder %s17, 1
    %p103 = por %p101, %p102
    %p105 = scmp.ne.s32.totalorder %s90, %s104
    %p106 = scmp.eq.s32.totalorder %s17, 0
    %p107 = por %p105, %p106
    %s109 = sadd.s32 %s108, 1
    %p112 = scmp.eq.s32.totalorder %s11, 1
    %p113 = scmp.ne.s32.totalorder %s108, %s110
    %p114 = scmp.eq.s32.totalorder %s11, 0
    %p115 = por %p113, %p114
    %p116 = scmp.ne.s32.totalorder %s108, %s110
    %p117 = scmp.eq.s32.totalorder %s16, 1
    %p118 = por %p116, %p117
    %p119 = scmp.ne.s32.totalorder %s110, %s111
    %p120 = scmp.eq.s32.totalorder %s16, 0
    %p121 = por %p119, %p120
    %p122 = scmp.ne.s32.totalorder %s110, %s111
    %p123 = scmp.eq.s32.totalorder %s17, 1
    %p124 = por %p122, %p123
    %p126 = scmp.ne.s32.totalorder %s111, %s125
    %p127 = scmp.eq.s32.totalorder %s17, 0
    %p128 = por %p126, %p127
    %s129 = ssub.s32 %s11, %s18
    %p130 = scmp.eq.s32.totalorder %s129, 0
    %s132 = sadd.s32 %s131, 1
    %s133 = scalar_select %p130, %s131, %s132
    %p136 = pneg %p130
    %p137 = scmp.eq.s32.totalorder %s11, 1
    %p138 = por %p136, %p137
    %p139 = scmp.ne.s32.totalorder %s131, %s134
    %p140 = scmp.eq.s32.totalorder %s11, 0
    %p141 = por %p139, %p140
    %p142 = scmp.ne.s32.totalorder %s131, %s134
    %p143 = scmp.eq.s32.totalorder %s16, 1
    %p144 = por %p142, %p143
    %p145 = scmp.ne.s32.totalorder %s134, %s135
    %p146 = scmp.eq.s32.totalorder %s16, 0
    %p147 = por %p145, %p146
    %p148 = scmp.ne.s32.totalorder %s134, %s135
    %p149 = scmp.eq.s32.totalorder %s17, 1
    %p150 = por %p148, %p149
    %p152 = scmp.ne.s32.totalorder %s135, %s151
    %p153 = scmp.eq.s32.totalorder %s17, 0
    %p154 = por %p152, %p153
    %p155 = scmp.le.s32.totalorder 1, %s11
    %p156 = scmp.lt.s32.totalorder %s11, 3
    %p157 = pnand %p155, %p156
    %p158 = pneg %p157
    // Predicated region
    $region9: #{_lambda_.1} parent=5 // pred_check
      _
    $region10: #{_lambda_.1} parent=5 // pred_check_branch
      %160 = sbr.rel (%p157) target = $region12
    $region11: #{_lambda_.1} parent=5 // pred_region
      %s161 = ssub.s32 %s11, 1
      // Predicated region
      $region13: #{_lambda_.1} parent=11 // pred_check
        %p162 = pneg %p58
      $region14: #{_lambda_.1} parent=11 // pred_check_branch
        %164 = sbr.rel (%p162) target = $region16
      $region15: #{_lambda_.1} parent=11 // pred_region
        _
      $region16: #{_lambda_.1} parent=11 // pred_fallthru
        _
      // Predicated region
      $region17: #{_lambda_.1} parent=11 // pred_check
        %p165 = pneg %p79
      $region18: #{_lambda_.1} parent=11 // pred_check_branch
        %167 = sbr.rel (%p165) target = $region20
      $region19: #{_lambda_.1} parent=11 // pred_region
        _
      $region20: #{_lambda_.1} parent=11 // pred_fallthru
        _
      // Predicated region
      $region21: #{_lambda_.1} parent=11 // pred_check
        %p168 = pneg %p100
      $region22: #{_lambda_.1} parent=11 // pred_check_branch
        %170 = sbr.rel (%p168) target = $region24
      $region23: #{_lambda_.1} parent=11 // pred_region
        _
      $region24: #{_lambda_.1} parent=11 // pred_fallthru
        _
      // Predicated region
      $region25: #{_lambda_.1} parent=11 // pred_check
        %p171 = pneg %p121
      $region26: #{_lambda_.1} parent=11 // pred_check_branch
        %173 = sbr.rel (%p171) target = $region28
      $region27: #{_lambda_.1} parent=11 // pred_region
        _
      $region28: #{_lambda_.1} parent=11 // pred_fallthru
        _
    $region12: #{_lambda_.1} parent=5 // pred_fallthru
      _
    %p174 = scmp.lt.s32.totalorder %s11, 2
    // Predicated region
    $region29: #{_lambda_.1} parent=5 // pred_check
      %p175 = pneg %p174
    $region30: #{_lambda_.1} parent=5 // pred_check_branch
      %177 = sbr.rel (%p175) target = $region32
    $region31: #{_lambda_.1} parent=5 // pred_region
      // Predicated region
      $region33: #{_lambda_.1} parent=31 // pred_check
        %p178 = pneg %p31
      $region34: #{_lambda_.1} parent=31 // pred_check_branch
        %180 = sbr.rel (%p178) target = $region36
      $region35: #{_lambda_.1} parent=31 // pred_region
        %s181 = smul.u32 2, %s11
        %p182 = scmp.lt.s32.totalorder %s181, 3
        %s183 = scalar_select %p182, %s181, 3
        %s184 = smul.addr %s183, 8
        %s185 = scalar_lea.vmem %s0, %s184
        %s186 = smul.u32 2, %s11
      $region36: #{_lambda_.1} parent=31 // pred_fallthru
        _
    $region32: #{_lambda_.1} parent=5 // pred_fallthru
      _
    %p187 = scmp.le.s32.totalorder 1, %s11
    %p188 = scmp.lt.s32.totalorder %s11, 3
    %p189 = pnand %p187, %p188
    %p190 = pneg %p189
    // Predicated region
    $region37: #{_lambda_.1} parent=5 // pred_check
      _
    $region38: #{_lambda_.1} parent=5 // pred_check_branch
      %192 = sbr.rel (%p189) target = $region40
    $region39: #{_lambda_.1} parent=5 // pred_region
      %s193 = ssub.s32 %s11, 1
      %s194 = smul.u32 2, %s16
      %p195 = scmp.lt.s32.totalorder %s194, 3
      %s196 = scalar_select %p195, %s194, 3
      %s197 = smul.addr %s196, 8
      %s198 = scalar_lea.vmem %s0, %s197
      %p199 = pneg %p37
      %p200 = pneg %p34
      %p201 = pneg %p58
      %p202 = pneg %p55
      %p203 = pneg %p79
      %p204 = pneg %p76
      %p205 = pneg %p100
      %p206 = pneg %p97
      %p207 = pneg %p121
      %p208 = pneg %p118
      %p209 = pneg %p147
      %p210 = pneg %p144
      %s211 = smul.u32 2, %s16
      %p212 = scmp.lt.s32.totalorder %s211, 3
      %s213 = scalar_select %p212, %s211, 3
      %s214 = smul.addr %s213, 8
      %s215 = scalar_lea.vmem %s5, %s214
      %s216 = smul.u32 2, %s16
      %p217 = scmp.lt.s32.totalorder %s216, 3
      %s218 = scalar_select %p217, %s216, 3
      %s219 = smul.addr %s218, 8
      %s220 = scalar_lea.vmem %s0, %s219
      %s221 = smul.u32 2, %s16
      %s222 = smul.u32 2, %s16
      %p223 = scmp.lt.s32.totalorder %s222, 3
      %s224 = scalar_select %p223, %s222, 3
      %s225 = smul.addr %s224, 8
      %s226 = scalar_lea.vmem %s5, %s225
      %s227 = smul.u32 2, %s16
      %v229 = vld [vmem:[%s220] sm:$0xff]
      %v230 = vld [vmem:[%s220 + $0x8] sm:$0xff]
      %v231 = vpack.c.bf16 %v230, %v229
      %v232 = vld [vmem:[%s1] sm:$0xff]
      %v233 = vld [vmem:[%s1 + $0x8] sm:$0xff]
      %v234 = vld [vmem:[%s1 + $0x10] sm:$0xff]
      %v235 = vld [vmem:[%s1 + $0x18] sm:$0xff]
      %v236 = vld [vmem:[%s1 + $0x20] sm:$0xff]
      %v237 = vld [vmem:[%s1 + $0x28] sm:$0xff]
      %v238 = vld [vmem:[%s1 + $0x30] sm:$0xff]
      %v239 = vld [vmem:[%s1 + $0x38] sm:$0xff]
      %v240 = vld [vmem:[%s1 + $0x40] sm:$0xff]
      %v241 = vld [vmem:[%s1 + $0x48] sm:$0xff]
      %v242 = vld [vmem:[%s1 + $0x50] sm:$0xff]
      %v243 = vld [vmem:[%s1 + $0x58] sm:$0xff]
      %v244 = vld [vmem:[%s1 + $0x60] sm:$0xff]
      %v245 = vld [vmem:[%s1 + $0x68] sm:$0xff]
      %v246 = vld [vmem:[%s1 + $0x70] sm:$0xff]
      %v247 = vld [vmem:[%s1 + $0x78] sm:$0xff]
      %v264 = vunpack.c.l.b16 %v232
      %v265 = vunpack.c.h.b16 %v232
      %v266 = vunpack.c.l.b16 %v233
      %v267 = vunpack.c.h.b16 %v233
      %v268 = vunpack.c.l.b16 %v234
      %v269 = vunpack.c.h.b16 %v234
      %v270 = vunpack.c.l.b16 %v235
      %v271 = vunpack.c.h.b16 %v235
      %v272 = vunpack.c.l.b16 %v236
      %v273 = vunpack.c.h.b16 %v236
      %v274 = vunpack.c.l.b16 %v237
      %v275 = vunpack.c.h.b16 %v237
      %v276 = vunpack.c.l.b16 %v238
      %v277 = vunpack.c.h.b16 %v238
      %v278 = vunpack.c.l.b16 %v239
      %v279 = vunpack.c.h.b16 %v239
      %v280 = vunpack.c.l.b16 %v240
      %v281 = vunpack.c.h.b16 %v240
      %v282 = vunpack.c.l.b16 %v241
      %v283 = vunpack.c.h.b16 %v241
      %v284 = vunpack.c.l.b16 %v242
      %v285 = vunpack.c.h.b16 %v242
      %v286 = vunpack.c.l.b16 %v243
      %v287 = vunpack.c.h.b16 %v243
      %v288 = vunpack.c.l.b16 %v244
      %v289 = vunpack.c.h.b16 %v244
      %v290 = vunpack.c.l.b16 %v245
      %v291 = vunpack.c.h.b16 %v245
      %v292 = vunpack.c.l.b16 %v246
      %v293 = vunpack.c.h.b16 %v246
      %v294 = vunpack.c.l.b16 %v247
      %v295 = vunpack.c.h.b16 %v247
      %v296 = vpack.c.b16 %v268, %v264
      %v297 = vpack.c.b16 %v269, %v265
      %v298 = vpack.c.b16 %v270, %v266
      %v299 = vpack.c.b16 %v271, %v267
      %v300 = vpack.c.b16 %v276, %v272
      %v301 = vpack.c.b16 %v277, %v273
      %v302 = vpack.c.b16 %v278, %v274
      %v303 = vpack.c.b16 %v279, %v275
      %v304 = vpack.c.b16 %v284, %v280
      %v305 = vpack.c.b16 %v285, %v281
      %v306 = vpack.c.b16 %v286, %v282
      %v307 = vpack.c.b16 %v287, %v283
      %v308 = vpack.c.b16 %v292, %v288
      %v309 = vpack.c.b16 %v293, %v289
      %v310 = vpack.c.b16 %v294, %v290
      %v311 = vpack.c.b16 %v295, %v291
      %vm328 = vcmask 523264
      %v330 = vsel %vm328, %v231, 0
      %332 = vmatprep.subr.bf16.mxu0 0
      %333 = vmatpush1.bf16.msra.mxu0 0
      %334 = vmatprep.subr.bf16.mxu0 0
      %335 = vmatpush1.bf16.msra.mxu0 0
      %336 = vmatprep.subr.bf16.mxu0 0
      %337 = vmatpush1.bf16.msra.mxu0 0
      %338 = vmatprep.subr.bf16.mxu0 0
      %339 = vmatpush1.bf16.msra.mxu0 0
      %340 = vmatprep.subr.bf16.mxu0 %v309
      %341 = vmatpush1.bf16.msra.mxu0 %v308
      %342 = vmatprep.subr.bf16.mxu0 %v305
      %343 = vmatpush1.bf16.msra.mxu0 %v304
      %344 = vmatprep.subr.bf16.mxu0 %v301
      %345 = vmatpush1.bf16.msra.mxu0 %v300
      %346 = vmatprep.subr.bf16.mxu0 %v297
      %347 = vmatpush1.bf16.msra.mxu0 %v296
      %348 = vmatprep.subr.bf16.mxu0 0
      %349 = vmatpush2.bf16.msra.mxu0 0
      %350 = vmatprep.subr.bf16.mxu0 0
      %351 = vmatpush2.bf16.msra.mxu0 0
      %352 = vmatprep.subr.bf16.mxu0 0
      %353 = vmatpush2.bf16.msra.mxu0 0
      %354 = vmatprep.subr.bf16.mxu0 0
      %355 = vmatpush2.bf16.msra.mxu0 0
      %356 = vmatprep.subr.bf16.mxu0 0
      %357 = vmatpush2.bf16.msra.mxu0 0
      %358 = vmatprep.subr.bf16.mxu0 0
      %359 = vmatpush2.bf16.msra.mxu0 0
      %360 = vmatprep.subr.bf16.mxu0 0
      %361 = vmatpush2.bf16.msra.mxu0 0
      %362 = vmatprep.subr.bf16.mxu0 0
      %363 = vmatpush2.bf16.msra.mxu0 0
      %364 = vmatprep.mubr.bf16.mxu0 0
      %365 = vmatmul.mubr.bf16.gmra.mxu0 %v330
      %v366 = vpop.f32.mrf.mxu0
      %v367 = vadd.f32 0.0, %v366
      %v368 = vpop.f32.mrf.mxu0
      %v369 = vadd.f32 0.0, %v368
      %v370 = vpop.f32.mrf.mxu0
      %v371 = vadd.f32 0.0, %v370
      %v372 = vpop.f32.mrf.mxu0
      %v373 = vadd.f32 0.0, %v372
      %374 = vdwg.mxu0
      %375 = vmatprep.subr.bf16.mxu0 0
      %376 = vmatpush1.bf16.msra.mxu0 0
      %377 = vmatprep.subr.bf16.mxu0 0
      %378 = vmatpush1.bf16.msra.mxu0 0
      %379 = vmatprep.subr.bf16.mxu0 0
      %380 = vmatpush1.bf16.msra.mxu0 0
      %381 = vmatprep.subr.bf16.mxu0 0
      %382 = vmatpush1.bf16.msra.mxu0 0
      %383 = vmatprep.subr.bf16.mxu0 %v311
      %384 = vmatpush1.bf16.msra.mxu0 %v310
      %385 = vmatprep.subr.bf16.mxu0 %v307
      %386 = vmatpush1.bf16.msra.mxu0 %v306
      %387 = vmatprep.subr.bf16.mxu0 %v303
      %388 = vmatpush1.bf16.msra.mxu0 %v302
      %389 = vmatprep.subr.bf16.mxu0 %v299
      %390 = vmatpush1.bf16.msra.mxu0 %v298
      %391 = vmatprep.subr.bf16.mxu0 0
      %392 = vmatpush2.bf16.msra.mxu0 0
      %393 = vmatprep.subr.bf16.mxu0 0
      %394 = vmatpush2.bf16.msra.mxu0 0
      %395 = vmatprep.subr.bf16.mxu0 0
      %396 = vmatpush2.bf16.msra.mxu0 0
      %397 = vmatprep.subr.bf16.mxu0 0
      %398 = vmatpush2.bf16.msra.mxu0 0
      %399 = vmatprep.subr.bf16.mxu0 0
      %400 = vmatpush2.bf16.msra.mxu0 0
      %401 = vmatprep.subr.bf16.mxu0 0
      %402 = vmatpush2.bf16.msra.mxu0 0
      %403 = vmatprep.subr.bf16.mxu0 0
      %404 = vmatpush2.bf16.msra.mxu0 0
      %405 = vmatprep.subr.bf16.mxu0 0
      %406 = vmatpush2.bf16.msra.mxu0 0
      %407 = vmatprep.mubr.bf16.mxu0 0
      %408 = vmatmul.mubr.bf16.gmra.mxu0 %v330
      %v409 = vpop.f32.mrf.mxu0
      %v410 = vadd.f32 0.0, %v409
      %v411 = vpop.f32.mrf.mxu0
      %v412 = vadd.f32 0.0, %v411
      %v413 = vpop.f32.mrf.mxu0
      %v414 = vadd.f32 0.0, %v413
      %v415 = vpop.f32.mrf.mxu0
      %v416 = vadd.f32 0.0, %v415
      %417 = vdwg.mxu0
      %v418 = vlaneseq
      %v419 = vshrl.u32 %v418, 7
      %v420 = vadd.s32 %v419, 8
      %v421 = vand.u32 %v419, 15
      %v422 = vand.u32 %v420, 15
      %vm423 = vcmp.eq.s32.totalorder %v421, 0
      %vm424 = vcmp.eq.s32.totalorder %v422, 0
      %v425 = vrot.slane %v367, 7
      %v426 = vrot.slane %v371, 7
      %vm427 = vcmp.lt.s32.totalorder %v419, 1
      %v428 = vsel %vm427, %v425, %v426
      %v429 = vsel %vm427, %v426, %v425
      %v430 = vsel %vm423, 0.0, %v429
      %v431 = vsel %vm424, 0.0, %v428
      %vm432 = vcmp.eq.s32.totalorder %v421, 15
      %vm433 = vcmp.eq.s32.totalorder %v422, 15
      %v434 = vrot.slane %v410, 1
      %v435 = vrot.slane %v414, 1
      %vm436 = vcmp.lt.s32.totalorder %v419, 7
      %v437 = vsel %vm436, %v434, %v435
      %v438 = vsel %vm436, %v435, %v434
      %v439 = vsel %vm432, 0.0, %v437
      %v440 = vsel %vm433, 0.0, %v438
      %v441 = vadd.f32 %v430, %v369
      %v442 = vadd.f32 %v431, %v373
      %v443 = vadd.f32 %v441, %v439
      %v444 = vadd.f32 %v442, %v440
      %v445 = vld [vmem:[%s2] sm:$0x1]
      %v447 = vlaneseq
      %v448 = vshrl.u32 %v447, 7
      %v449 = vsub.s32 0, %v448
      %v450 = vrot.slane %v445, %v449
      %v452 = vadd.f32 %v443, %v450
      %v453 = vadd.f32 %v444, %v450
      %v454 = vmax.f32 %v452, 0.0
      %v455 = vmax.f32 %v453, 0.0
      %v456 = vpack.c.bf16 %v455, %v454
      %v457 = vld [vmem:[%s3] sm:$0xf]
      %v458 = vld [vmem:[%s3 + $0x4] sm:$0xf]
      %v459 = vld [vmem:[%s3 + $0x8] sm:$0xf]
      %v460 = vld [vmem:[%s3 + $0xc] sm:$0xf]
      %v461 = vld [vmem:[%s3 + $0x10] sm:$0xf]
      %v462 = vld [vmem:[%s3 + $0x14] sm:$0xf]
      %v463 = vld [vmem:[%s3 + $0x18] sm:$0xf]
      %v464 = vld [vmem:[%s3 + $0x1c] sm:$0xf]
      %v465 = vld [vmem:[%s3 + $0x20] sm:$0xf]
      %v466 = vld [vmem:[%s3 + $0x24] sm:$0xf]
      %v467 = vld [vmem:[%s3 + $0x28] sm:$0xf]
      %v468 = vld [vmem:[%s3 + $0x2c] sm:$0xf]
      %v469 = vld [vmem:[%s3 + $0x30] sm:$0xf]
      %v470 = vld [vmem:[%s3 + $0x34] sm:$0xf]
      %v471 = vld [vmem:[%s3 + $0x38] sm:$0xf]
      %v472 = vld [vmem:[%s3 + $0x3c] sm:$0xf]
      %v489 = vunpack.c.l.b16 %v457
      %v490 = vunpack.c.l.b16 %v458
      %v491 = vunpack.c.l.b16 %v459
      %v492 = vunpack.c.l.b16 %v460
      %v493 = vunpack.c.l.b16 %v461
      %v494 = vunpack.c.l.b16 %v462
      %v495 = vunpack.c.l.b16 %v463
      %v496 = vunpack.c.l.b16 %v464
      %v497 = vunpack.c.l.b16 %v465
      %v498 = vunpack.c.l.b16 %v466
      %v499 = vunpack.c.l.b16 %v467
      %v500 = vunpack.c.l.b16 %v468
      %v501 = vunpack.c.l.b16 %v469
      %v502 = vunpack.c.l.b16 %v470
      %v503 = vunpack.c.l.b16 %v471
      %v504 = vunpack.c.l.b16 %v472
      %v505 = vpack.c.b16 %v490, %v489
      %v506 = vpack.c.b16 %v492, %v491
      %v507 = vpack.c.b16 %v494, %v493
      %v508 = vpack.c.b16 %v496, %v495
      %v509 = vpack.c.b16 %v498, %v497
      %v510 = vpack.c.b16 %v500, %v499
      %v511 = vpack.c.b16 %v502, %v501
      %v512 = vpack.c.b16 %v504, %v503
      %521 = vmatprep.subr.bf16.mxu0 0
      %522 = vmatpush1.bf16.msra.mxu0 %v512
      %523 = vmatprep.subr.bf16.mxu0 0
      %524 = vmatpush1.bf16.msra.mxu0 %v511
      %525 = vmatprep.subr.bf16.mxu0 0
      %526 = vmatpush1.bf16.msra.mxu0 %v510
      %527 = vmatprep.subr.bf16.mxu0 0
      %528 = vmatpush1.bf16.msra.mxu0 %v509
      %529 = vmatprep.subr.bf16.mxu0 0
      %530 = vmatpush1.bf16.msra.mxu0 %v508
      %531 = vmatprep.subr.bf16.mxu0 0
      %532 = vmatpush1.bf16.msra.mxu0 %v507
      %533 = vmatprep.subr.bf16.mxu0 0
      %534 = vmatpush1.bf16.msra.mxu0 %v506
      %535 = vmatprep.subr.bf16.mxu0 0
      %536 = vmatpush1.bf16.msra.mxu0 %v505
      %537 = vmatprep.subr.bf16.mxu0 0
      %538 = vmatpush2.bf16.msra.mxu0 0
      %539 = vmatprep.subr.bf16.mxu0 0
      %540 = vmatpush2.bf16.msra.mxu0 0
      %541 = vmatprep.subr.bf16.mxu0 0
      %542 = vmatpush2.bf16.msra.mxu0 0
      %543 = vmatprep.subr.bf16.mxu0 0
      %544 = vmatpush2.bf16.msra.mxu0 0
      %545 = vmatprep.subr.bf16.mxu0 0
      %546 = vmatpush2.bf16.msra.mxu0 0
      %547 = vmatprep.subr.bf16.mxu0 0
      %548 = vmatpush2.bf16.msra.mxu0 0
      %549 = vmatprep.subr.bf16.mxu0 0
      %550 = vmatpush2.bf16.msra.mxu0 0
      %551 = vmatprep.subr.bf16.mxu0 0
      %552 = vmatpush2.bf16.msra.mxu0 0
      %553 = vmatprep.mubr.bf16.mxu0 0
      %554 = vmatmul.mubr.bf16.gmra.mxu0 %v456
      %v555 = vpop.f32.mrf.mxu0
      %v556 = vadd.f32 %v412, %v555
      %v557 = vpop.f32.mrf.mxu0
      %v558 = vpop.f32.mrf.mxu0
      %v559 = vadd.f32 %v416, %v558
      %v560 = vpop.f32.mrf.mxu0
      %561 = vdwg.mxu0
      %v562 = vld [vmem:[%s4] sm:$0x1]
      %v564 = vlaneseq
      %v565 = vshrl.u32 %v564, 7
      %v566 = vsub.s32 0, %v565
      %v567 = vrot.slane %v562, %v566
      %v569 = vadd.f32 %v556, %v567
      %v570 = vadd.f32 %v559, %v567
      %571 = vst [vmem:[%s226] sm:$0xff] %v569
      %572 = vst [vmem:[%s226 + $0x8] sm:$0xff] %v570
      %s573 = smul.u32 2, %s16
      %p574 = scmp.lt.s32.totalorder %s573, 3
      %s575 = scalar_select %p574, %s573, 3
      %s576 = smul.addr %s575, 8
      %s577 = scalar_lea.vmem %s5, %s576
      // Predicated region
      $region41: #{_lambda_.1} parent=39 // pred_check
        %p578 = pneg %p144
      $region42: #{_lambda_.1} parent=39 // pred_check_branch
        %580 = sbr.rel (%p578) target = $region44
      $region43: #{_lambda_.1} parent=39 // pred_region
        %s581 = smul.u32 2, %s16
      $region44: #{_lambda_.1} parent=39 // pred_fallthru
        _
    $region40: #{_lambda_.1} parent=5 // pred_fallthru
      _
    %p582 = scmp.le.s32.totalorder 2, %s11
    // Predicated region
    $region45: #{_lambda_.1} parent=5 // pred_check
      %p583 = pneg %p582
    $region46: #{_lambda_.1} parent=5 // pred_check_branch
      %585 = sbr.rel (%p583) target = $region48
    $region47: #{_lambda_.1} parent=5 // pred_region
      %s586 = ssub.s32 %s11, 2
      // Predicated region
      $region49: #{_lambda_.1} parent=47 // pred_check
        %p587 = pneg %p150
      $region50: #{_lambda_.1} parent=47 // pred_check_branch
        %589 = sbr.rel (%p587) target = $region52
      $region51: #{_lambda_.1} parent=47 // pred_region
        %s590 = smul.u32 2, %s17
        %p591 = scmp.lt.s32.totalorder %s590, 3
        %s592 = scalar_select %p591, %s590, 3
        %s593 = smul.addr %s592, 8
        %s594 = scalar_lea.vmem %s5, %s593
      $region52: #{_lambda_.1} parent=47 // pred_fallthru
        _
    $region48: #{_lambda_.1} parent=5 // pred_fallthru
      _
  $region6: #{_lambda_.1} parent=0 // loop_footer
    %s15 = sadd.s32 1, %s11
  $region7: #{_lambda_.1} parent=0 // loop_footer_branch
    %10 = sbr.rel target = $region3
  $region8: #{_lambda_.1} parent=0 // loop_exit
    _

</llo_original>
